<compile_context>
chip_gen: v7x
topology: tpu7x:2x2x1
jax: 0.10.0
libtpu: 0.0.40
codegen_flags: <defaults>
</compile_context>

<pallas_src>
import jax
import jax.numpy as jnp
from jax.experimental import pallas as pl
from jax.experimental.pallas import tpu as pltpu

_ALPHA_KEEP = 0.9


def _round_up(x, m):
    return ((x + m - 1) // m) * m


def _cross_stitch_kernel(alpha_ref, x1_ref, x2_ref, o1_ref, o2_ref):
    """Per-row 2x2 cross-stitch mix on a (TM, TN) tile.

    alpha_ref: (TM, 4) f32 rows of [a00, a01, a10, a11]
    x1_ref/x2_ref/o1_ref/o2_ref: (TM, TN) tiles in the input dtype.
    """
    a = alpha_ref[...]                       # (TM, 4), f32
    x1 = x1_ref[...]                         # (TM, TN)
    x2 = x2_ref[...]
    a00 = a[:, 0:1]                          # (TM, 1) -> broadcast over lanes
    a01 = a[:, 1:2]
    a10 = a[:, 2:3]
    a11 = a[:, 3:4]
    o1_ref[...] = (x1 * a00 + x2 * a01).astype(o1_ref.dtype)
    o2_ref[...] = (x1 * a10 + x2 * a11).astype(o2_ref.dtype)


def make_cross_stitch_params(size):
    """Deterministic parameter init matching the PyTorch __init__."""
    assert len(size) in (4, 2)
    c = size[1] if len(size) == 4 else 1
    unit = jnp.array([[_ALPHA_KEEP, 1.0 - _ALPHA_KEEP],
                      [1.0 - _ALPHA_KEEP, _ALPHA_KEEP]], dtype=jnp.float32)
    return jnp.tile(unit[None, :, :], (c, 1, 1))          # (C, 2, 2)


def _mix_2d(x1_2d, x2_2d, alpha_rows, *, tm_cap=256, tn_cap=1024):
    """Tiled cross-stitch mix on a (rows, cols) view with per-row (rows,4) alpha."""
    rows, cols = x1_2d.shape
    itemsize = jnp.dtype(x1_2d.dtype).itemsize
    sub = max(8, 32 // itemsize)             # sublane tile: f32->8, bf16->16, i8->32

    tn = min(_round_up(cols, 128), tn_cap)   # lane-dense tile width
    tm = min(_round_up(rows, sub), tm_cap)
    rows_p = _round_up(rows, tm)
    cols_p = _round_up(cols, tn)

    needs_pad = (rows_p, cols_p) != (rows, cols)
    if needs_pad:
        x1_2d = jnp.pad(x1_2d, ((0, rows_p - rows), (0, cols_p - cols)))
        x2_2d = jnp.pad(x2_2d, ((0, rows_p - rows), (0, cols_p - cols)))
        alpha_rows = jnp.pad(alpha_rows, ((0, rows_p - rows), (0, 0)))

    grid = (rows_p // tm, cols_p // tn)
    x_spec = pl.BlockSpec((tm, tn), lambda i, j: (i, j))
    a_spec = pl.BlockSpec((tm, 4), lambda i, j: (i, 0))

    o1, o2 = pl.pallas_call(
        _cross_stitch_kernel,
        out_shape=(jax.ShapeDtypeStruct((rows_p, cols_p), x1_2d.dtype),
                   jax.ShapeDtypeStruct((rows_p, cols_p), x1_2d.dtype)),
        grid=grid,
        in_specs=[a_spec, x_spec, x_spec],
        out_specs=(x_spec, x_spec),
        compiler_params=pltpu.CompilerParams(
            dimension_semantics=("parallel", "parallel")),
    )(alpha_rows, x1_2d, x2_2d)

    if needs_pad:
        o1 = o1[:rows, :cols]
        o2 = o2[:rows, :cols]
    return o1, o2


def cross_stitch_forward(x1, x2, alpha):
    """Pallas implementation of CrossStitchUnit.forward for 4D or 2D inputs."""
    assert x1.ndim == x2.ndim

    if x1.ndim == 4:
        n, c, h, w = x1.shape
        assert alpha.shape == (c, 2, 2)
        rows, cols = n * c, h * w
        x1r = x1.reshape(rows, cols)
        x2r = x2.reshape(rows, cols)
        # Row r = n*C + c shares channel c's coefficients [a00, a01, a10, a11].
        alpha_rows = jnp.tile(alpha.reshape(c, 4).astype(jnp.float32), (n, 1))
        o1, o2 = _mix_2d(x1r, x2r, alpha_rows)
        return o1.reshape(x1.shape), o2.reshape(x1.shape)

    elif x1.ndim == 2:
        b, f = x1.shape
        assert alpha.shape == (1, 2, 2)
        # B rows on sublanes, F features on lanes (full vreg occupancy).
        alpha_rows = jnp.tile(alpha.reshape(1, 4).astype(jnp.float32), (b, 1))
        o1, o2 = _mix_2d(x1, x2, alpha_rows)
        if b == 1:  # mimic torch .squeeze() dropping the size-1 batch dim
            o1, o2 = o1.reshape(f), o2.reshape(f)
        return o1, o2

    else:
        raise ValueError("CrossStitchUnit expects 2D or 4D inputs")


def _reference_forward(x1, x2, alpha):
    """Pure-JAX reference mirroring the PyTorch matmul formulation."""
    if x1.ndim == 4:
        n, c, h, w = x1.shape
        xt = jnp.stack([x1.reshape(n, c, -1), x2.reshape(n, c, -1)], axis=2)  # (N,C,2,HW)
        ot = jnp.einsum('cij,ncjk->ncik', alpha, xt)
        return ot[:, :, 0, :].reshape(x1.shape), ot[:, :, 1, :].reshape(x1.shape)
    else:
        b, f = x1.shape
        xt = jnp.stack([x1, x2], axis=1)                                      # (B,2,F)
        ot = jnp.einsum('ij,bjk->bik', alpha[0], xt)
        o1, o2 = ot[:, 0, :], ot[:, 1, :]
        if b == 1:
            o1, o2 = o1.reshape(f), o2.reshape(f)
        return o1, o2


if __name__ == "__main__":
    key = jax.random.PRNGKey(0)
    k1, k2, k3, k4 = jax.random.split(key, 4)

    # --- 4D path (NCHW): batch=2, channels=4, spatial=16x16 ---
    shape4 = (2, 4, 16, 16)
    x1 = jax.random.normal(k1, shape4, dtype=jnp.float32)
    x2 = jax.random.normal(k2, shape4, dtype=jnp.float32)
    alpha4 = make_cross_stitch_params(shape4)

    o1, o2 = cross_stitch_forward(x1, x2, alpha4)
    jax.block_until_ready((o1, o2))

    r1, r2 = _reference_forward(x1, x2, alpha4)
    assert o1.shape == shape4 and o2.shape == shape4
    assert jnp.allclose(o1, r1, atol=1e-5), "4D output1 mismatch"
    assert jnp.allclose(o2, r2, atol=1e-5), "4D output2 mismatch"

    # --- 2D path: batch=8, hidden=32 (exercises lane padding 32 -> 128) ---
    shape2 = (8, 32)
    y1 = jax.random.normal(k3, shape2, dtype=jnp.float32)
    y2 = jax.random.normal(k4, shape2, dtype=jnp.float32)
    alpha2 = make_cross_stitch_params(shape2)

    p1, p2 = cross_stitch_forward(y1, y2, alpha2)
    jax.block_until_ready((p1, p2))

    q1, q2 = _reference_forward(y1, y2, alpha2)
    assert p1.shape == shape2 and p2.shape == shape2
    assert jnp.allclose(p1, q1, atol=1e-5), "2D output1 mismatch"
    assert jnp.allclose(p2, q2, atol=1e-5), "2D output2 mismatch"

    print("KERNEL_OK")
</pallas_src>

<mosaic_0001>
module attributes {stable_mosaic.version = 11 : i64} {
  func.func @_cross_stitch_kernel(%arg0: i32, %arg1: i32, %arg2: memref<8x4xf32, #tpu.memory_space<vmem>>, %arg3: memref<8x256xf32, #tpu.memory_space<vmem>>, %arg4: memref<8x256xf32, #tpu.memory_space<vmem>>, %arg5: memref<8x256xf32, #tpu.memory_space<vmem>>, %arg6: memref<8x256xf32, #tpu.memory_space<vmem>>) attributes {dimension_semantics = [#tpu.dimension_semantics<parallel>, #tpu.dimension_semantics<parallel>], iteration_bounds = array<i64: 1, 1>, scalar_prefetch = 0 : i64, scratch_operands = 0 : i64, tpu.core_type = #tpu.core_type<tc>, window_params = [{transform_indices = @transform_0, window_bounds = array<i64: 8, 4>}, {transform_indices = @transform_1, window_bounds = array<i64: 8, 256>}, {transform_indices = @transform_2, window_bounds = array<i64: 8, 256>}, {transform_indices = @transform_3, window_bounds = array<i64: 8, 256>}, {transform_indices = @transform_4, window_bounds = array<i64: 8, 256>}]} {
    %c0 = arith.constant 0 : index
    %c0_0 = arith.constant 0 : index
    %0 = vector.load %arg2[%c0, %c0_0] : memref<8x4xf32, #tpu.memory_space<vmem>>, vector<8x4xf32>
    %c0_1 = arith.constant 0 : index
    %c0_2 = arith.constant 0 : index
    %1 = vector.load %arg3[%c0_1, %c0_2] : memref<8x256xf32, #tpu.memory_space<vmem>>, vector<8x256xf32>
    %c0_3 = arith.constant 0 : index
    %c0_4 = arith.constant 0 : index
    %2 = vector.load %arg4[%c0_3, %c0_4] : memref<8x256xf32, #tpu.memory_space<vmem>>, vector<8x256xf32>
    %3 = vector.extract_strided_slice %0 {offsets = [0, 0], sizes = [8, 1], strides = [1, 1]} : vector<8x4xf32> to vector<8x1xf32>
    %4 = vector.extract_strided_slice %0 {offsets = [0, 1], sizes = [8, 1], strides = [1, 1]} : vector<8x4xf32> to vector<8x1xf32>
    %5 = vector.extract_strided_slice %0 {offsets = [0, 2], sizes = [8, 1], strides = [1, 1]} : vector<8x4xf32> to vector<8x1xf32>
    %6 = vector.extract_strided_slice %0 {offsets = [0, 3], sizes = [8, 1], strides = [1, 1]} : vector<8x4xf32> to vector<8x1xf32>
    %7 = vector.broadcast %3 : vector<8x1xf32> to vector<8x256xf32>
    %8 = arith.mulf %1, %7 : vector<8x256xf32>
    %9 = vector.broadcast %4 : vector<8x1xf32> to vector<8x256xf32>
    %10 = arith.mulf %2, %9 : vector<8x256xf32>
    %11 = arith.addf %8, %10 : vector<8x256xf32>
    %c0_5 = arith.constant 0 : index
    %c0_6 = arith.constant 0 : index
    %12 = vector.load %arg5[%c0_5, %c0_6] : memref<8x256xf32, #tpu.memory_space<vmem>>, vector<8x256xf32>
    tpu.vector_store %arg5[%c0_5, %c0_6], %11 {strides = array<i32>} : memref<8x256xf32, #tpu.memory_space<vmem>>, vector<8x256xf32>,
    %13 = vector.broadcast %5 : vector<8x1xf32> to vector<8x256xf32>
    %14 = arith.mulf %1, %13 : vector<8x256xf32>
    %15 = vector.broadcast %6 : vector<8x1xf32> to vector<8x256xf32>
    %16 = arith.mulf %2, %15 : vector<8x256xf32>
    %17 = arith.addf %14, %16 : vector<8x256xf32>
    %c0_7 = arith.constant 0 : index
    %c0_8 = arith.constant 0 : index
    %18 = vector.load %arg6[%c0_7, %c0_8] : memref<8x256xf32, #tpu.memory_space<vmem>>, vector<8x256xf32>
    tpu.vector_store %arg6[%c0_7, %c0_8], %17 {strides = array<i32>} : memref<8x256xf32, #tpu.memory_space<vmem>>, vector<8x256xf32>,
    return
  }
  func.func @transform_0(%arg0: i32, %arg1: i32) -> (i32, i32) {
    %c0_i32 = arith.constant 0 : i32
    %c0_i32_0 = arith.constant 0 : i32
    return %arg0, %c0_i32 : i32, i32
  }
  func.func @transform_1(%arg0: i32, %arg1: i32) -> (i32, i32) {
    %c0_i32 = arith.constant 0 : i32
    return %arg0, %arg1 : i32, i32
  }
  func.func @transform_2(%arg0: i32, %arg1: i32) -> (i32, i32) {
    %c0_i32 = arith.constant 0 : i32
    return %arg0, %arg1 : i32, i32
  }
  func.func @transform_3(%arg0: i32, %arg1: i32) -> (i32, i32) {
    %c0_i32 = arith.constant 0 : i32
    return %arg0, %arg1 : i32, i32
  }
  func.func @transform_4(%arg0: i32, %arg1: i32) -> (i32, i32) {
    %c0_i32 = arith.constant 0 : i32
    return %arg0, %arg1 : i32, i32
  }
}

</mosaic_0001>

<llo_original>
// kernel: tpu_custom_call.1
$region0: #{tpu_custom_call.1}
  #allocation0 [shape = 'u32[]', space=smem, size = 0x4, offset = 0x4, fixed_abs, tag = 'smem constant byte address 0x4 - core index']
  #allocation1 [shape = 'u32[144,128]{1,0:T(1,128)}', space=vmem, size = 0x12000, scoped, tag = 'internal scratch']
  %s0 = inlined_call_operand.vmem [shape: f32[8,4], index: 0, kind: input, shape index: {}]
  %s1 = inlined_call_operand.hbm [shape: f32[8,256], index: 1, kind: input, shape index: {}]
  %s2 = inlined_call_operand.vmem [shape: f32[8,256], index: 2, kind: input, shape index: {}]
  %s3 = inlined_call_operand.hbm [shape: f32[8,256], index: 3, kind: output, shape index: {0}]
  %s4 = inlined_call_operand.hbm [shape: f32[8,256], index: 4, kind: output, shape index: {1}]
  %5 = xla_tuple %s3, %s4
  %s6 = sld [smem:[#allocation0]]
  $region34: #{tpu_custom_call.1} parent=0
    _
  %s8 = ssub.s32 1, %s6
  %s9 = scalar_select 0, %s8, %s6
  $region1: #{tpu_custom_call.1} parent=0
    #allocation2 [shape = 'u8[8192]{0}', space=vmem, size = 0x2000, scoped, tag = 'input window, operand 1, single buffered']
    #allocation3 [shape = 's32[1]{0}', space=sflag, size = 0x4, scoped, tag = 'scoped memory for tpu_custom_call.1']
    #allocation4 [shape = 's32[1]{0}', space=sflag, size = 0x4, scoped, tag = 'scoped memory for tpu_custom_call.1']
    #allocation5 [shape = 'u8[8192]{0}', space=vmem, size = 0x2000, scoped, tag = 'output window, operand 0, single buffered']
    #allocation6 [shape = 'u8[8192]{0}', space=vmem, size = 0x2000, scoped, tag = 'output window, operand 1, single buffered']
    #allocation7 [shape = 's32[1]{0}', space=sflag, size = 0x4, scoped, tag = 'scoped memory for tpu_custom_call.1']
    %10 = vsyncpa [#allocation3], 0
    %11 = vsyncpa [#allocation4], 0
    %12 = vsyncpa [#allocation7], 0
    // Predicated region
    $region2: #{tpu_custom_call.1} parent=1 // pred_check
      _
    $region3: #{tpu_custom_call.1} parent=1 // pred_check_branch
      %14 = sbr.rel (0) target = $region5
    $region4: #{tpu_custom_call.1} parent=1 // pred_region
      _
    $region5: #{tpu_custom_call.1} parent=1 // pred_fallthru
      _
    // Predicated region
    $region6: #{tpu_custom_call.1} parent=1 // pred_check
      _
    $region7: #{tpu_custom_call.1} parent=1 // pred_check_branch
      %16 = sbr.rel (0) target = $region9
    $region8: #{tpu_custom_call.1} parent=1 // pred_region
      %s18 = ssub.s32 256, 256
      %19 = vsyncadd [#allocation3], %s18
      %s21 = sshll.u32 [#allocation2], 4
      %s22 = int_to_ptr.vmem [resolvable:$true] %s21
      %24 = dma.hbm_to_vmem [thread:$0]  %s1, 256, %s22, [#allocation3]
    $region9: #{tpu_custom_call.1} parent=1 // pred_fallthru
      _
    // Predicated region
    $region10: #{tpu_custom_call.1} parent=1 // pred_check
      _
    $region11: #{tpu_custom_call.1} parent=1 // pred_check_branch
      %26 = sbr.rel (0) target = $region13
    $region12: #{tpu_custom_call.1} parent=1 // pred_region
      _
    $region13: #{tpu_custom_call.1} parent=1 // pred_fallthru
      _
    // Predicated region
    $region14: #{tpu_custom_call.1} parent=1 // pred_check
      _
    $region15: #{tpu_custom_call.1} parent=1 // pred_check_branch
      %28 = sbr.rel (0) target = $region17
    $region16: #{tpu_custom_call.1} parent=1 // pred_region
      %29 = dma.done [#allocation3], 256
    $region17: #{tpu_custom_call.1} parent=1 // pred_fallthru
      _
    %v30 = vld [vmem:[%s0] sm:$0xff]
    %v31 = vld [vmem:[#allocation2] sm:$0xff]
    %v32 = vld [vmem:[#allocation2 + $0x8] sm:$0xff]
    %v33 = vld [vmem:[%s2] sm:$0xff]
    %v34 = vld [vmem:[%s2 + $0x8] sm:$0xff]
    %36 = vset.pattern.permute.xlu0 0
    %37 = vperm.xlu0 %36, %v30
    %v38 = vpop.permute.xlu0 %37
    %v40 = vmul.f32 %v31, %v38
    %v41 = vmul.f32 %v32, %v38
    %42 = vset.pattern.permute.xlu0 1
    %43 = vperm.xlu0 %42, %v30
    %v44 = vpop.permute.xlu0 %43
    %v46 = vmul.f32 %v33, %v44
    %v47 = vmul.f32 %v34, %v44
    %v48 = vadd.f32 %v40, %v46
    %v49 = vadd.f32 %v41, %v47
    %50 = vst [vmem:[#allocation5] sm:$0xff] %v48
    %51 = vst [vmem:[#allocation5 + $0x8] sm:$0xff] %v49
    %52 = vset.pattern.permute.xlu0 2
    %53 = vperm.xlu0 %52, %v30
    %v54 = vpop.permute.xlu0 %53
    %v56 = vmul.f32 %v31, %v54
    %v57 = vmul.f32 %v32, %v54
    %58 = vset.pattern.permute.xlu0 3
    %59 = vperm.xlu0 %58, %v30
    %v60 = vpop.permute.xlu0 %59
    %v62 = vmul.f32 %v33, %v60
    %v63 = vmul.f32 %v34, %v60
    %v64 = vadd.f32 %v56, %v62
    %v65 = vadd.f32 %v57, %v63
    %66 = vst [vmem:[#allocation6] sm:$0xff] %v64
    %67 = vst [vmem:[#allocation6 + $0x8] sm:$0xff] %v65
    // Predicated region
    $region18: #{tpu_custom_call.1} parent=1 // pred_check
      _
    $region19: #{tpu_custom_call.1} parent=1 // pred_check_branch
      %69 = sbr.rel (0) target = $region21
    $region20: #{tpu_custom_call.1} parent=1 // pred_region
      %s71 = ssub.s32 256, 256
      %72 = vsyncadd [#allocation4], %s71
      %s74 = sshll.u32 [#allocation5], 4
      %s75 = int_to_ptr.vmem [resolvable:$true] %s74
      %77 = dma.vmem_to_hbm [thread:$0]  %s75, 256, %s3, [#allocation4]
    $region21: #{tpu_custom_call.1} parent=1 // pred_fallthru
      _
    // Predicated region
    $region22: #{tpu_custom_call.1} parent=1 // pred_check
      _
    $region23: #{tpu_custom_call.1} parent=1 // pred_check_branch
      %79 = sbr.rel (0) target = $region25
    $region24: #{tpu_custom_call.1} parent=1 // pred_region
      %s81 = ssub.s32 256, 256
      %82 = vsyncadd [#allocation7], %s81
      %s84 = sshll.u32 [#allocation6], 4
      %s85 = int_to_ptr.vmem [resolvable:$true] %s84
      %87 = dma.vmem_to_hbm [thread:$0]  %s85, 256, %s4, [#allocation7]
    $region25: #{tpu_custom_call.1} parent=1 // pred_fallthru
      _
    // Predicated region
    $region26: #{tpu_custom_call.1} parent=1 // pred_check
      _
    $region27: #{tpu_custom_call.1} parent=1 // pred_check_branch
      %89 = sbr.rel (0) target = $region29
    $region28: #{tpu_custom_call.1} parent=1 // pred_region
      %90 = dma.done [#allocation4], 256
    $region29: #{tpu_custom_call.1} parent=1 // pred_fallthru
      _
    // Predicated region
    $region30: #{tpu_custom_call.1} parent=1 // pred_check
      _
    $region31: #{tpu_custom_call.1} parent=1 // pred_check_branch
      %92 = sbr.rel (0) target = $region33
    $region32: #{tpu_custom_call.1} parent=1 // pred_region
      %93 = dma.done [#allocation7], 256
    $region33: #{tpu_custom_call.1} parent=1 // pred_fallthru
      _
    %94 = vsyncpa [#allocation3], 1
    %95 = vsyncpa [#allocation4], 1
    %96 = vsyncpa [#allocation7], 1

</llo_original>
